<compile_context>
chip_gen: v5e
topology: v5e:2x2
jax: 0.10.0
libtpu: 0.0.40
codegen_flags: <defaults>
</compile_context>

<pallas_src>
import math

import jax
import jax.numpy as jnp
from jax.experimental import pallas as pl
from jax.experimental.pallas import tpu as pltpu

_LANE = 128


def make_pos_enc(max_num_seg: int, d_model: int, num_seg: int, seg_len: int) -> jnp.ndarray:
    """Deterministic sinusoidal positional-encoding buffer, matching __init__."""
    assert d_model % 2 == 0, "d_model must be even (matches the PyTorch buffer layout)"
    length = max_num_seg if seg_len < 512 else seg_len
    position = jnp.arange(length, dtype=jnp.float32)[:, None]                      # (L, 1)
    div_term = jnp.exp(
        jnp.arange(0, d_model, 2, dtype=jnp.float32) * -(math.log(10000.0) / d_model)
    )                                                                               # (D/2,)
    pe = jnp.zeros((length, d_model), dtype=jnp.float32)
    pe = pe.at[:, 0::2].set(jnp.sin(position * div_term))
    pe = pe.at[:, 1::2].set(jnp.cos(position * div_term))
    if seg_len < 512:
        return pe[:num_seg]        # (num_seg, d_model)
    return pe[None]                # (1, seg_len, d_model)


def _add_pe_kernel(x_ref, pe_ref, o_ref):
    # x_ref: (tb, tn); pe_ref: (1, tn) -> implicit sublane broadcast; o_ref: (tb, tn).
    o_ref[...] = (x_ref[...] + pe_ref[...]).astype(o_ref.dtype)


def _device_config():
    """(target block bytes, vmem_limit_bytes or None, min grid steps) per generation."""
    kind = ""
    try:
        kind = jax.devices()[0].device_kind.lower()
    except Exception:
        pass
    if "v7" in kind:
        # ~3.2 TB/s HBM: bigger blocks amortise the ~0.35us/step overhead.
        # 2x x + 2x out double-buffers at 6 MiB ~= 24 MiB (<64 MiB physical).
        return 6 << 20, 48 << 20, 2      # 2 TensorCores -> want >= 2 grid steps
    if "v6" in kind:
        return 4 << 20, 48 << 20, 1      # 32 MiB scoped default, 128 MiB physical
    # v5e / v5p / v4 / older / unknown: 2 MiB blocks fit every default scoped limit.
    return 2 << 20, None, 1


def _choose_tiles(B: int, SD: int, itemsize: int, target_bytes: int, min_steps: int):
    # Sublane pack for the dtype: 8 rows for f32, 16 for bf16, 32 for int8/fp8.
    sub_pack = 8 * max(1, 4 // itemsize)
    lane_ok = SD >= _LANE and SD % _LANE == 0

    if lane_ok:
        if B <= sub_pack or B * _LANE * itemsize <= target_bytes:
            # Small fused-batch axis: take it whole, then fill the byte target
            # along the lane axis (multiple of 128 -> lane-dense stores).
            tb = B
            tn = (target_bytes // max(1, tb * itemsize)) // _LANE * _LANE
            tn = max(_LANE, min(SD, tn))
        else:
            # Large batch: prefer whole rows (contiguous DMA), tile the batch
            # on sublane-pack boundaries to fill the byte target.
            tn = SD if SD * itemsize <= target_bytes else max(
                _LANE, (target_bytes // itemsize) // _LANE * _LANE)
            tn = min(tn, SD)
            rows = max(1, target_bytes // (tn * itemsize))
            tb = max(sub_pack, (rows // sub_pack) * sub_pack)
            if tb >= B:
                tb = B
    else:
        # Unaligned / tiny fused axis: must take it whole (full-dim block is legal).
        tn = SD
        rows = max(1, target_bytes // max(1, tn * itemsize))
        if rows >= B:
            tb = B
        else:
            tb = max(sub_pack, (rows // sub_pack) * sub_pack)
            if tb >= B:
                tb = B

    # v7x: guarantee at least `min_steps` blocks so both TensorCores get work,
    # but only when the tensor is big enough for the split to matter.
    if min_steps > 1 and B * SD * itemsize >= (1 << 20):
        while pl.cdiv(B, tb) * pl.cdiv(SD, tn) < min_steps:
            if tn > _LANE and tn % _LANE == 0:
                new_tn = max(_LANE, ((tn // 2) // _LANE) * _LANE)
                if new_tn == tn:
                    break
                tn = new_tn
            elif tb > 8:
                new_tb = max(8, ((tb // 2) // 8) * 8)
                if new_tb == tb:
                    break
                tb = new_tb
            else:
                break
    return tb, tn


def positional_encoding_forward(x: jnp.ndarray, pos_enc: jnp.ndarray,
                                *, donate_x: bool = False) -> jnp.ndarray:
    """x: (B, S, D); pos_enc: (S, D) or (1, S, D). Returns x + pos_enc (broadcast over B)."""
    B, S, D = x.shape
    if pos_enc.ndim == 3:                  # seg_len >= 512 branches: (1, S, D) buffer
        assert pos_enc.shape == (1, S, D), f"pos_enc {pos_enc.shape} vs x {(B, S, D)}"
        pos_enc = pos_enc[0]
    assert pos_enc.shape == (S, D), f"pos_enc {pos_enc.shape} vs x {(B, S, D)}"

    # Match the PyTorch module: the f32 buffer promotes the add, the result is
    # rounded once (pe is NOT pre-cast to a narrower x dtype).
    out_dtype = jnp.promote_types(x.dtype, pos_enc.dtype)

    SD = S * D
    x2 = x.reshape(B, SD)                  # fused, lane-dense trailing axis
    pe2 = pos_enc.reshape(1, SD)

    out_itemsize = jnp.dtype(out_dtype).itemsize
    target_bytes, vmem_limit, min_steps = _device_config()
    tb, tn = _choose_tiles(B, SD, out_itemsize, target_bytes, min_steps)

    # Batch-tile axis INNERMOST: the pe block index (0, j) is constant across
    # the inner sweep, so Pallas skips the redundant per-step pe DMA.
    grid = (pl.cdiv(SD, tn), pl.cdiv(B, tb))

    x_item = jnp.dtype(x.dtype).itemsize
    pe_item = jnp.dtype(pos_enc.dtype).itemsize
    cost = pl.CostEstimate(
        flops=B * SD,
        transcendentals=0,
        # x read + out write per element, pe read once per lane tile (total SD).
        bytes_accessed=B * SD * (x_item + out_itemsize) + SD * pe_item,
    )

    cp_kwargs = dict(dimension_semantics=("parallel", "parallel"))  # v7x TC sharding
    if vmem_limit is not None:
        cp_kwargs["vmem_limit_bytes"] = vmem_limit

    out2 = pl.pallas_call(
        _add_pe_kernel,
        out_shape=jax.ShapeDtypeStruct((B, SD), out_dtype),
        grid_spec=pltpu.PrefetchScalarGridSpec(
            num_scalar_prefetch=0,
            grid=grid,
            in_specs=[
                pl.BlockSpec((tb, tn), lambda j, i: (i, j)),    # x tile
                pl.BlockSpec((1, tn), lambda j, i: (0, j)),     # pe: fixed over inner axis
            ],
            out_specs=pl.BlockSpec((tb, tn), lambda j, i: (i, j)),
        ),
        compiler_params=pltpu.CompilerParams(**cp_kwargs),
        cost_estimate=cost,
        # Optional: alias x -> out when the caller no longer needs x (same dtype only).
        input_output_aliases=({0: 0} if (donate_x and x.dtype == out_dtype) else {}),
    )(x2, pe2)

    return out2.reshape(B, S, D)


if __name__ == "__main__":
    # Small shapes consistent with the module: seg_len < 512 branch.
    max_num_seg, d_model, num_seg, seg_len = 16, 32, 8, 8
    batch = 2

    pos_enc = make_pos_enc(max_num_seg, d_model, num_seg, seg_len)   # (8, 32)

    key = jax.random.PRNGKey(0)
    x = jax.random.normal(key, (batch, num_seg, d_model), dtype=jnp.float32)

    out = jax.block_until_ready(positional_encoding_forward(x, pos_enc))

    # Reference check (pure JAX broadcast add, same semantics as PyTorch forward).
    ref = x + (pos_enc if pos_enc.ndim == 3 else pos_enc[None, :, :])
    assert out.shape == ref.shape and out.dtype == ref.dtype
    assert jnp.allclose(out, ref, atol=1e-6), "mismatch vs reference"

    print("KERNEL_OK")
</pallas_src>

<mosaic_0001>
module attributes {stable_mosaic.version = 11 : i64} {
  func.func @_add_pe_kernel(%arg0: i32, %arg1: i32, %arg2: memref<2x256xf32, #tpu.memory_space<vmem>>, %arg3: memref<1x256xf32, #tpu.memory_space<vmem>>, %arg4: memref<2x256xf32, #tpu.memory_space<vmem>>) attributes {dimension_semantics = [#tpu.dimension_semantics<parallel>, #tpu.dimension_semantics<parallel>], iteration_bounds = array<i64: 1, 1>, scalar_prefetch = 0 : i64, scratch_operands = 0 : i64, tpu.core_type = #tpu.core_type<tc>, window_params = [{transform_indices = @transform_0, window_bounds = array<i64: 2, 256>}, {transform_indices = @transform_1, window_bounds = array<i64: 1, 256>}, {transform_indices = @transform_2, window_bounds = array<i64: 2, 256>}]} {
    %c0 = arith.constant 0 : index
    %c0_0 = arith.constant 0 : index
    %0 = vector.load %arg2[%c0, %c0_0] : memref<2x256xf32, #tpu.memory_space<vmem>>, vector<2x256xf32>
    %c0_1 = arith.constant 0 : index
    %c0_2 = arith.constant 0 : index
    %1 = vector.load %arg3[%c0_1, %c0_2] : memref<1x256xf32, #tpu.memory_space<vmem>>, vector<1x256xf32>
    %2 = vector.broadcast %1 : vector<1x256xf32> to vector<2x256xf32>
    %3 = arith.addf %0, %2 : vector<2x256xf32>
    %c0_3 = arith.constant 0 : index
    %c0_4 = arith.constant 0 : index
    %4 = vector.load %arg4[%c0_3, %c0_4] : memref<2x256xf32, #tpu.memory_space<vmem>>, vector<2x256xf32>
    tpu.vector_store %arg4[%c0_3, %c0_4], %3 {strides = array<i32>} : memref<2x256xf32, #tpu.memory_space<vmem>>, vector<2x256xf32>,
    return
  }
  func.func @transform_0(%arg0: i32, %arg1: i32) -> (i32, i32) {
    %c0_i32 = arith.constant 0 : i32
    return %arg1, %arg0 : i32, i32
  }
  func.func @transform_1(%arg0: i32, %arg1: i32) -> (i32, i32) {
    %c0_i32 = arith.constant 0 : i32
    %c0_i32_0 = arith.constant 0 : i32
    return %c0_i32, %arg0 : i32, i32
  }
  func.func @transform_2(%arg0: i32, %arg1: i32) -> (i32, i32) {
    %c0_i32 = arith.constant 0 : i32
    return %arg1, %arg0 : i32, i32
  }
}

</mosaic_0001>

<llo_original>
// kernel: tpu_custom_call.1
$region0: #{tpu_custom_call.1}
  #allocation0 [shape = 'u32[]', space=smem, size = 0x4, offset = 0x4, fixed_abs, tag = 'smem constant byte address 0x4 - core index']
  #allocation1 [shape = 'u32[72,128]{1,0:T(1,128)}', space=vmem, size = 0x9000, scoped, tag = 'internal scratch']
  %s0 = inlined_call_operand.hbm [shape: f32[2,256], index: 0, kind: input, shape index: {}]
  %s1 = inlined_call_operand.hbm [shape: f32[1,256], index: 1, kind: input, shape index: {}]
  %s2 = inlined_call_operand.hbm [shape: f32[2,256], index: 2, kind: output, shape index: {}]
  %s3 = sld [smem:[#allocation0]]
  $region26: #{tpu_custom_call.1} parent=0
    _
  %s5 = ssub.s32 1, %s3
  %s6 = scalar_select 0, %s5, %s3
  $region1: #{tpu_custom_call.1} parent=0
    #allocation2 [shape = 'u8[2048]{0}', space=vmem, size = 0x800, scoped, tag = 'input window, operand 0, single buffered']
    #allocation3 [shape = 's32[1]{0}', space=sflag, size = 0x4, scoped, tag = 'scoped memory for tpu_custom_call.1']
    #allocation4 [shape = 's32[1]{0}', space=sflag, size = 0x4, scoped, tag = 'scoped memory for tpu_custom_call.1']
    #allocation5 [shape = 'u8[1024]{0}', space=vmem, size = 0x400, scoped, tag = 'input window, operand 1, single buffered']
    #allocation6 [shape = 's32[1]{0}', space=sflag, size = 0x4, scoped, tag = 'scoped memory for tpu_custom_call.1']
    #allocation7 [shape = 'u8[2048]{0}', space=vmem, size = 0x800, scoped, tag = 'output window, operand 0, single buffered']
    %7 = vsyncpa [#allocation3], 0
    %8 = vsyncpa [#allocation6], 0
    %9 = vsyncpa [#allocation4], 0
    // Predicated region
    $region2: #{tpu_custom_call.1} parent=1 // pred_check
      _
    $region3: #{tpu_custom_call.1} parent=1 // pred_check_branch
      %11 = sbr.rel (0) target = $region5
    $region4: #{tpu_custom_call.1} parent=1 // pred_region
      %13 = vsyncadd [#allocation3], 0
      %s15 = sshll.u32 %s0, 4
      %s16 = int_to_ptr.hbm [resolvable:$true] %s15
      %s17 = sshll.u32 [#allocation2], 4
      %s18 = int_to_ptr.vmem [resolvable:$true] %s17
      %20 = dma.hbm_to_vmem [thread:$0]  %s16, 64, %s18, [#allocation3]
    $region5: #{tpu_custom_call.1} parent=1 // pred_fallthru
      _
    // Predicated region
    $region6: #{tpu_custom_call.1} parent=1 // pred_check
      _
    $region7: #{tpu_custom_call.1} parent=1 // pred_check_branch
      %22 = sbr.rel (0) target = $region9
    $region8: #{tpu_custom_call.1} parent=1 // pred_region
      %24 = vsyncadd [#allocation6], 0
      %s26 = sshll.u32 %s1, 4
      %s27 = int_to_ptr.hbm [resolvable:$true] %s26
      %s28 = sshll.u32 [#allocation5], 4
      %s29 = int_to_ptr.vmem [resolvable:$true] %s28
      %31 = dma.hbm_to_vmem [thread:$0]  %s27, 32, %s29, [#allocation6]
    $region9: #{tpu_custom_call.1} parent=1 // pred_fallthru
      _
    // Predicated region
    $region10: #{tpu_custom_call.1} parent=1 // pred_check
      _
    $region11: #{tpu_custom_call.1} parent=1 // pred_check_branch
      %33 = sbr.rel (0) target = $region13
    $region12: #{tpu_custom_call.1} parent=1 // pred_region
      %35 = dma.done [#allocation3], 64
    $region13: #{tpu_custom_call.1} parent=1 // pred_fallthru
      _
    // Predicated region
    $region14: #{tpu_custom_call.1} parent=1 // pred_check
      _
    $region15: #{tpu_custom_call.1} parent=1 // pred_check_branch
      %37 = sbr.rel (0) target = $region17
    $region16: #{tpu_custom_call.1} parent=1 // pred_region
      %39 = dma.done [#allocation6], 32
    $region17: #{tpu_custom_call.1} parent=1 // pred_fallthru
      _
    %v40 = vld [vmem:[#allocation2] sm:$0xf]
    %v41 = vld [vmem:[#allocation5] sm:$0x3]
    %v43 = vperm.slane %v41, 0
    %v44 = vperm.slane %v41, 1
    %v45 = vrot.slane %v44, 6
    %vm46 = vcmask 1041408
    %v47 = vsel %vm46, %v43, %v45
    %v49 = vadd.f32 %v40, %v47
    %50 = vst [vmem:[#allocation7] sm:$0xf] %v49
    // Predicated region
    $region18: #{tpu_custom_call.1} parent=1 // pred_check
      _
    $region19: #{tpu_custom_call.1} parent=1 // pred_check_branch
      %52 = sbr.rel (0) target = $region21
    $region20: #{tpu_custom_call.1} parent=1 // pred_region
      %54 = vsyncadd [#allocation4], 0
      %s56 = sshll.u32 [#allocation7], 4
      %s57 = int_to_ptr.vmem [resolvable:$true] %s56
      %s58 = sshll.u32 %s2, 4
      %s59 = int_to_ptr.hbm [resolvable:$true] %s58
      %61 = dma.vmem_to_hbm [thread:$0]  %s57, 64, %s59, [#allocation4]
    $region21: #{tpu_custom_call.1} parent=1 // pred_fallthru
      _
    // Predicated region
    $region22: #{tpu_custom_call.1} parent=1 // pred_check
      _
    $region23: #{tpu_custom_call.1} parent=1 // pred_check_branch
      %63 = sbr.rel (0) target = $region25
    $region24: #{tpu_custom_call.1} parent=1 // pred_region
      %65 = dma.done [#allocation4], 64
    $region25: #{tpu_custom_call.1} parent=1 // pred_fallthru
      _
    %66 = vsyncpa [#allocation3], 1
    %67 = vsyncpa [#allocation6], 1
    %68 = vsyncpa [#allocation4], 1

</llo_original>
